<compile_context>
chip_gen: v6e
topology: v6e:2x2x1
jax: 0.10.0
libtpu: 0.0.40
codegen_flags: <defaults>
</compile_context>

<pallas_src>
import math

import jax
import jax.numpy as jnp
from jax.experimental import pallas as pl
from jax.experimental.pallas import tpu as pltpu


def _fbn_kernel(x_ref, scale_ref, shift_ref, o_ref):
    # scale/shift are either (br, 1) columns (broadcast over lanes) or a full
    # (br, lanes) slab; the same body covers both via broadcasting.
    x = x_ref[...].astype(jnp.float32)
    o_ref[...] = (x * scale_ref[...] + shift_ref[...]).astype(o_ref.dtype)


def _round_up(x, m):
    return (x + m - 1) // m * m


def _vmem_capacity_bytes():
    try:
        cap = int(pltpu.get_tpu_info().vmem_capacity_bytes)
        if cap > 0:
            return cap
    except Exception:
        pass
    return 128 << 20  # v5e/v6e-style default if the query is unavailable


def _choose_group(C, hw, lane_target=512, lane_cap=8192):
    """Channel-group size g (divisor of C); g*hw becomes the lane axis."""
    best_any = None
    best_under_cap = 1
    for g in range(1, C + 1):
        if C % g:
            continue
        lanes = g * hw
        if lanes > lane_cap:
            break
        best_under_cap = g
        if lanes >= lane_target:
            if best_any is None:
                best_any = g
            if lanes % 128 == 0:
                return g            # lane-dense and 128-aligned: ideal
    if best_any is not None:
        return best_any             # >= target, unaligned tail only
    return best_under_cap


def _even_row_blocks(rows, br, mult, other_blocks):
    """Best-effort: make the total number of parallel blocks even (v7x 2 TCs)."""
    if br >= rows:
        return br
    gi = pl.cdiv(rows, br)
    if gi <= 1 or (gi * other_blocks) % 2 == 0:
        return br
    br2 = min(br, _round_up(pl.cdiv(rows, gi + 1), mult))
    if br2 >= mult and (pl.cdiv(rows, br2) * other_blocks) % 2 == 0:
        return br2
    return br


def frozen_batch_norm_2d(x, weight, bias, running_mean, running_var, eps=1e-5,
                         *, tile_bytes=None):
    """FrozenBatchNorm2d forward. x: (N, C, H, W); weight/bias/running_*: (C,)."""
    N, C, H, W = x.shape
    out_dtype = x.dtype
    itemsize = jnp.dtype(out_dtype).itemsize
    sub = max(8, 32 // itemsize)            # sublane multiple for x's dtype
    hw = H * W

    cap = _vmem_capacity_bytes()
    vmem_limit = int(min(cap // 2, 64 << 20))

    # Fold frozen stats + affine into per-channel scale & shift (f32 math,
    # matching the PyTorch buffer dtype).
    scale_c = (weight.astype(jnp.float32)
               * jax.lax.rsqrt(running_var.astype(jnp.float32) + eps))        # (C,)
    shift_c = bias.astype(jnp.float32) - running_mean.astype(jnp.float32) * scale_c

    if hw >= 512:
        # ---------- Path 1: spatial axis is already lane-dense ----------
        target = tile_bytes if tile_bytes is not None else max(1 << 20, cap // 16)
        rows = N * C
        x2d = x.reshape(rows, hw)
        scale_rows = jnp.broadcast_to(scale_c, (N, C)).reshape(rows, 1)
        shift_rows = jnp.broadcast_to(shift_c, (N, C)).reshape(rows, 1)

        if hw * sub * itemsize <= target:
            bhw = hw                                   # full lane extent
        else:
            bhw = max(128, (target // (sub * itemsize)) // 128 * 128)
        gj = pl.cdiv(hw, bhw)
        br = max(sub, (target // (bhw * itemsize)) // sub * sub)
        if br >= rows:
            br = rows
        else:
            br = _even_row_blocks(rows, br, sub, gj)
        gi = pl.cdiv(rows, br)

        out2d = pl.pallas_call(
            _fbn_kernel,
            out_shape=jax.ShapeDtypeStruct((rows, hw), out_dtype),
            grid=(gi, gj),
            in_specs=[
                pl.BlockSpec((br, bhw), lambda i, j: (i, j)),
                # Block index depends only on i; with the lane axis innermost
                # the pipeline re-uses these tiny columns across lane tiles.
                pl.BlockSpec((br, 1), lambda i, j: (i, 0)),
                pl.BlockSpec((br, 1), lambda i, j: (i, 0)),
            ],
            out_specs=pl.BlockSpec((br, bhw), lambda i, j: (i, j)),
            compiler_params=pltpu.CompilerParams(
                dimension_semantics=("parallel", "parallel"),
                vmem_limit_bytes=vmem_limit),
            cost_estimate=pl.CostEstimate(
                flops=2 * rows * hw, transcendentals=0,
                bytes_accessed=2 * rows * hw * itemsize + 2 * rows * 4),
        )(x2d, scale_rows, shift_rows)
        return out2d.reshape(N, C, H, W)

    # ---------- Path 2: small spatial maps — fold channel groups into lanes ----------
    target = tile_bytes if tile_bytes is not None else max(1 << 19, cap // 32)
    g = _choose_group(C, hw)
    cg = C // g                                 # channel groups per image
    rows = N * cg
    lanes = g * hw
    x2d = x.reshape(rows, lanes)                # contiguous NCHW reshape (free)

    mult = (sub * cg) // math.gcd(sub, cg)      # lcm(cg, sublane multiple)
    br = max(mult, (target // (lanes * itemsize)) // mult * mult)
    if br >= rows:
        br = rows                               # full row extent (always legal)
    else:
        br = _even_row_blocks(rows, br, mult, 1)
    gi = pl.cdiv(rows, br)

    # One row-block's worth of per-channel scale/shift, pre-broadcast over the
    # folded lane axis (br is a multiple of cg, or br == rows == N*cg), so the
    # row pattern lines up with every x row block.
    reps = br // cg

    def _slab(v):
        pat = jnp.broadcast_to(v.reshape(cg, g, 1), (cg, g, hw)).reshape(cg, lanes)
        return jnp.tile(pat, (reps, 1))

    scale_slab = _slab(scale_c)
    shift_slab = _slab(shift_c)

    out2d = pl.pallas_call(
        _fbn_kernel,
        out_shape=jax.ShapeDtypeStruct((rows, lanes), out_dtype),
        grid=(gi,),
        in_specs=[
            pl.BlockSpec((br, lanes), lambda i: (i, 0)),
            # Grid-resident: block index never changes, so the slabs are
            # DMA'd into VMEM exactly once for the whole grid.
            pl.BlockSpec((br, lanes), lambda i: (0, 0)),
            pl.BlockSpec((br, lanes), lambda i: (0, 0)),
        ],
        out_specs=pl.BlockSpec((br, lanes), lambda i: (i, 0)),
        compiler_params=pltpu.CompilerParams(
            dimension_semantics=("parallel",),
            vmem_limit_bytes=vmem_limit),
        cost_estimate=pl.CostEstimate(
            flops=2 * rows * lanes, transcendentals=0,
            bytes_accessed=2 * rows * lanes * itemsize + 2 * br * lanes * 4),
    )(x2d, scale_slab, shift_slab)
    return out2d.reshape(N, C, H, W)


if __name__ == "__main__":
    def _ref(x, w, b, rm, rv, eps=1e-5):
        scale = (w * jax.lax.rsqrt(rv + eps)).reshape(1, -1, 1, 1)
        shift = b.reshape(1, -1, 1, 1) - rm.reshape(1, -1, 1, 1) * scale
        return (x.astype(jnp.float32) * scale + shift).astype(x.dtype)

    key = jax.random.PRNGKey(0)
    cases = [
        # (shape, dtype, tile_bytes override)
        ((2, 4, 16, 16), jnp.float32, None),        # small maps -> channel folding
        ((2, 16, 7, 7), jnp.float32, None),         # C5-like 7x7: 49 lanes, folded, non-128
        ((2, 8, 24, 24), jnp.bfloat16, None),       # lane-dense path, bf16, 576-lane tail
        ((1, 20, 40, 37), jnp.float32, 16 << 10),   # tiny tiles: masked row & lane edges
    ]
    for shape, dtype, tb in cases:
        N, C, H, W = shape
        key, kx, kw, kb, km, kv = jax.random.split(key, 6)
        x = jax.random.normal(kx, shape, dtype=jnp.float32).astype(dtype)
        weight = 1.0 + 0.1 * jax.random.normal(kw, (C,), dtype=jnp.float32)
        bias = 0.1 * jax.random.normal(kb, (C,), dtype=jnp.float32)
        running_mean = 0.05 * jax.random.normal(km, (C,), dtype=jnp.float32)
        running_var = jnp.abs(1.0 + 0.1 * jax.random.normal(kv, (C,), dtype=jnp.float32))

        out = frozen_batch_norm_2d(x, weight, bias, running_mean, running_var,
                                   eps=1e-5, tile_bytes=tb)
        out = jax.block_until_ready(out)
        ref = _ref(x, weight, bias, running_mean, running_var, eps=1e-5)

        assert out.shape == x.shape and out.dtype == x.dtype
        tol = 1e-5 if dtype == jnp.float32 else 2e-2
        assert jnp.allclose(out.astype(jnp.float32), ref.astype(jnp.float32),
                            atol=tol, rtol=tol), f"mismatch for {shape}"

    print("KERNEL_OK")
</pallas_src>

<mosaic_0001>
module attributes {stable_mosaic.version = 11 : i64} {
  func.func @_fbn_kernel(%arg0: i32, %arg1: memref<4x512xf32, #tpu.memory_space<vmem>>, %arg2: memref<4x512xf32, #tpu.memory_space<vmem>>, %arg3: memref<4x512xf32, #tpu.memory_space<vmem>>, %arg4: memref<4x512xf32, #tpu.memory_space<vmem>>) attributes {dimension_semantics = [#tpu.dimension_semantics<parallel>], iteration_bounds = array<i64: 1>, scalar_prefetch = 0 : i64, scratch_operands = 0 : i64, tpu.core_type = #tpu.core_type<tc>, window_params = [{transform_indices = @transform_0, window_bounds = array<i64: 4, 512>}, {pipeline_mode = #tpu.pipeline_mode<synchronous>, transform_indices = @transform_1, window_bounds = array<i64: 4, 512>}, {pipeline_mode = #tpu.pipeline_mode<synchronous>, transform_indices = @transform_2, window_bounds = array<i64: 4, 512>}, {transform_indices = @transform_3, window_bounds = array<i64: 4, 512>}]} {
    %c0 = arith.constant 0 : index
    %c0_0 = arith.constant 0 : index
    %0 = vector.load %arg1[%c0, %c0_0] : memref<4x512xf32, #tpu.memory_space<vmem>>, vector<4x512xf32>
    %c0_1 = arith.constant 0 : index
    %c0_2 = arith.constant 0 : index
    %1 = vector.load %arg2[%c0_1, %c0_2] : memref<4x512xf32, #tpu.memory_space<vmem>>, vector<4x512xf32>
    %2 = arith.mulf %0, %1 : vector<4x512xf32>
    %c0_3 = arith.constant 0 : index
    %c0_4 = arith.constant 0 : index
    %3 = vector.load %arg3[%c0_3, %c0_4] : memref<4x512xf32, #tpu.memory_space<vmem>>, vector<4x512xf32>
    %4 = arith.addf %2, %3 : vector<4x512xf32>
    %c0_5 = arith.constant 0 : index
    %c0_6 = arith.constant 0 : index
    %5 = vector.load %arg4[%c0_5, %c0_6] : memref<4x512xf32, #tpu.memory_space<vmem>>, vector<4x512xf32>
    tpu.vector_store %arg4[%c0_5, %c0_6], %4 {strides = array<i32>} : memref<4x512xf32, #tpu.memory_space<vmem>>, vector<4x512xf32>,
    return
  }
  func.func @transform_0(%arg0: i32) -> (i32, i32) {
    %c0_i32 = arith.constant 0 : i32
    %c0_i32_0 = arith.constant 0 : i32
    return %arg0, %c0_i32 : i32, i32
  }
  func.func @transform_1(%arg0: i32) -> (i32, i32) {
    %c0_i32 = arith.constant 0 : i32
    %c0_i32_0 = arith.constant 0 : i32
    %c0_i32_1 = arith.constant 0 : i32
    return %c0_i32, %c0_i32_0 : i32, i32
  }
  func.func @transform_2(%arg0: i32) -> (i32, i32) {
    %c0_i32 = arith.constant 0 : i32
    %c0_i32_0 = arith.constant 0 : i32
    %c0_i32_1 = arith.constant 0 : i32
    return %c0_i32, %c0_i32_0 : i32, i32
  }
  func.func @transform_3(%arg0: i32) -> (i32, i32) {
    %c0_i32 = arith.constant 0 : i32
    %c0_i32_0 = arith.constant 0 : i32
    return %arg0, %c0_i32 : i32, i32
  }
}

</mosaic_0001>

<llo_original>
// kernel: tpu_custom_call.1
$region0: #{tpu_custom_call.1}
  #allocation0 [shape = 'u32[]', space=smem, size = 0x4, offset = 0x4, fixed_abs, tag = 'smem constant byte address 0x4 - core index']
  #allocation1 [shape = 'u32[144,128]{1,0:T(1,128)}', space=vmem, size = 0x12000, scoped, tag = 'internal scratch']
  %s0 = inlined_call_operand.hbm [shape: f32[4,512], index: 0, kind: input, shape index: {}]
  %s1 = inlined_call_operand.hbm [shape: f32[4,512], index: 1, kind: input, shape index: {}]
  %s2 = inlined_call_operand.hbm [shape: f32[4,512], index: 2, kind: input, shape index: {}]
  %s3 = inlined_call_operand.hbm [shape: f32[4,512], index: 3, kind: output, shape index: {}]
  %s4 = sld [smem:[#allocation0]]
  $region34: #{tpu_custom_call.1} parent=0
    _
  %s6 = ssub.s32 1, %s4
  %s7 = scalar_select 0, %s6, %s4
  $region1: #{tpu_custom_call.1} parent=0
    #allocation2 [shape = 'u8[8192]{0}', space=vmem, size = 0x2000, scoped, tag = 'input window, operand 0, single buffered']
    #allocation3 [shape = 's32[1]{0}', space=sflag, size = 0x4, scoped, tag = 'scoped memory for tpu_custom_call.1']
    #allocation4 [shape = 's32[1]{0}', space=sflag, size = 0x4, scoped, tag = 'scoped memory for tpu_custom_call.1']
    #allocation5 [shape = 'u8[8192]{0}', space=vmem, size = 0x2000, scoped, tag = 'input window, operand 1, single buffered']
    #allocation6 [shape = 's32[1]{0}', space=sflag, size = 0x4, scoped, tag = 'scoped memory for tpu_custom_call.1']
    #allocation7 [shape = 'u8[8192]{0}', space=vmem, size = 0x2000, scoped, tag = 'input window, operand 2, single buffered']
    #allocation8 [shape = 'u8[8192]{0}', space=vmem, size = 0x2000, scoped, tag = 'output window, operand 0, single buffered']
    %8 = vsyncpa [#allocation3], 0
    %9 = vsyncpa [#allocation6], 0
    %10 = vsyncpa [#allocation4], 0
    // Predicated region
    $region2: #{tpu_custom_call.1} parent=1 // pred_check
      _
    $region3: #{tpu_custom_call.1} parent=1 // pred_check_branch
      %12 = sbr.rel (0) target = $region5
    $region4: #{tpu_custom_call.1} parent=1 // pred_region
      %s14 = ssub.s32 256, 256
      %15 = vsyncadd [#allocation3], %s14
      %s17 = sshll.u32 [#allocation2], 4
      %s18 = int_to_ptr.vmem [resolvable:$true] %s17
      %20 = dma.hbm_to_vmem [thread:$0]  %s0, 256, %s18, [#allocation3]
    $region5: #{tpu_custom_call.1} parent=1 // pred_fallthru
      _
    // Predicated region
    $region6: #{tpu_custom_call.1} parent=1 // pred_check
      _
    $region7: #{tpu_custom_call.1} parent=1 // pred_check_branch
      %22 = sbr.rel (0) target = $region9
    $region8: #{tpu_custom_call.1} parent=1 // pred_region
      %s24 = ssub.s32 256, 256
      %25 = vsyncadd [#allocation6], %s24
      %s27 = sshll.u32 [#allocation5], 4
      %s28 = int_to_ptr.vmem [resolvable:$true] %s27
      %30 = dma.hbm_to_vmem [thread:$0]  %s1, 256, %s28, [#allocation6]
    $region9: #{tpu_custom_call.1} parent=1 // pred_fallthru
      _
    // Predicated region
    $region10: #{tpu_custom_call.1} parent=1 // pred_check
      _
    $region11: #{tpu_custom_call.1} parent=1 // pred_check_branch
      %32 = sbr.rel (0) target = $region13
    $region12: #{tpu_custom_call.1} parent=1 // pred_region
      %s34 = ssub.s32 256, 256
      %35 = vsyncadd [#allocation6], %s34
      %s37 = sshll.u32 [#allocation7], 4
      %s38 = int_to_ptr.vmem [resolvable:$true] %s37
      %40 = dma.hbm_to_vmem [thread:$0]  %s2, 256, %s38, [#allocation6]
    $region13: #{tpu_custom_call.1} parent=1 // pred_fallthru
      _
    // Predicated region
    $region14: #{tpu_custom_call.1} parent=1 // pred_check
      _
    $region15: #{tpu_custom_call.1} parent=1 // pred_check_branch
      %42 = sbr.rel (0) target = $region17
    $region16: #{tpu_custom_call.1} parent=1 // pred_region
      %43 = dma.done [#allocation3], 256
    $region17: #{tpu_custom_call.1} parent=1 // pred_fallthru
      _
    // Predicated region
    $region18: #{tpu_custom_call.1} parent=1 // pred_check
      _
    $region19: #{tpu_custom_call.1} parent=1 // pred_check_branch
      %45 = sbr.rel (0) target = $region21
    $region20: #{tpu_custom_call.1} parent=1 // pred_region
      %46 = dma.done [#allocation6], 256
    $region21: #{tpu_custom_call.1} parent=1 // pred_fallthru
      _
    // Predicated region
    $region22: #{tpu_custom_call.1} parent=1 // pred_check
      _
    $region23: #{tpu_custom_call.1} parent=1 // pred_check_branch
      %48 = sbr.rel (0) target = $region25
    $region24: #{tpu_custom_call.1} parent=1 // pred_region
      %49 = dma.done [#allocation6], 256
    $region25: #{tpu_custom_call.1} parent=1 // pred_fallthru
      _
    %v50 = vld [vmem:[#allocation2] sm:$0xff]
    %v51 = vld [vmem:[#allocation2 + $0x8] sm:$0xff]
    %v52 = vld [vmem:[#allocation5] sm:$0xff]
    %v53 = vld [vmem:[#allocation5 + $0x8] sm:$0xff]
    %v54 = vmul.f32 %v50, %v52
    %v55 = vmul.f32 %v51, %v53
    %v56 = vld [vmem:[#allocation7] sm:$0xff]
    %v57 = vld [vmem:[#allocation7 + $0x8] sm:$0xff]
    %v58 = vadd.f32 %v54, %v56
    %v59 = vadd.f32 %v55, %v57
    %60 = vst [vmem:[#allocation8] sm:$0xff] %v58
    %61 = vst [vmem:[#allocation8 + $0x8] sm:$0xff] %v59
    // Predicated region
    $region26: #{tpu_custom_call.1} parent=1 // pred_check
      _
    $region27: #{tpu_custom_call.1} parent=1 // pred_check_branch
      %63 = sbr.rel (0) target = $region29
    $region28: #{tpu_custom_call.1} parent=1 // pred_region
      %s65 = ssub.s32 256, 256
      %66 = vsyncadd [#allocation4], %s65
      %s68 = sshll.u32 [#allocation8], 4
      %s69 = int_to_ptr.vmem [resolvable:$true] %s68
      %71 = dma.vmem_to_hbm [thread:$0]  %s69, 256, %s3, [#allocation4]
    $region29: #{tpu_custom_call.1} parent=1 // pred_fallthru
      _
    // Predicated region
    $region30: #{tpu_custom_call.1} parent=1 // pred_check
      _
    $region31: #{tpu_custom_call.1} parent=1 // pred_check_branch
      %73 = sbr.rel (0) target = $region33
    $region32: #{tpu_custom_call.1} parent=1 // pred_region
      %74 = dma.done [#allocation4], 256
    $region33: #{tpu_custom_call.1} parent=1 // pred_fallthru
      _
    %75 = vsyncpa [#allocation3], 1
    %76 = vsyncpa [#allocation6], 1
    %77 = vsyncpa [#allocation4], 1

</llo_original>
